<compile_context>
chip_gen: v7x
topology: tpu7x:2x2x1
jax: 0.10.0
libtpu: 0.0.40
codegen_flags: <defaults>
</compile_context>

<pallas_src>
import math

import jax
import jax.numpy as jnp
from jax.experimental import pallas as pl
from jax.experimental.pallas import tpu as pltpu


def bilinear_matrix(n_in, n_out):
    """Interpolation matrix M (n_out, n_in) for 1-D bilinear resize, align_corners=True."""
    if n_in == 1:
        return jnp.ones((n_out, 1), jnp.float32)
    idx = jnp.arange(n_out, dtype=jnp.float32)
    src = idx * (n_in - 1) / (n_out - 1)
    lo = jnp.clip(jnp.floor(src).astype(jnp.int32), 0, n_in - 2)
    frac = src - lo.astype(jnp.float32)
    m = jnp.zeros((n_out, n_in), jnp.float32)
    rows = jnp.arange(n_out)
    m = m.at[rows, lo].add(1.0 - frac)
    m = m.at[rows, lo + 1].add(frac)
    return m


def _block_diag(m, nb):
    """kron(I_nb, m) for a 2-D matrix m."""
    eye = jnp.eye(nb, dtype=m.dtype)
    r, c = m.shape
    return (eye[:, None, :, None] * m[None, :, None, :]).reshape(nb * r, nb * c)


def _make_kernel(K):
    def kernel(xt_ref, uw_ref, at_ref, brow_ref, o_ref):
        # xt: (W, NB*C*H)  -- lane-dense (last dim multiple of 128 or full array dim)
        xt = xt_ref[...].astype(jnp.float32)
        acc = None
        for k in range(K):  # K = 3 (with conv) or 1 (plain upsample); fully static
            # width upsample (+ conv x-offset, zero-padded) : (Wo, W) @ (W, NB*C*H)
            t = jnp.dot(uw_ref[k], xt, preferred_element_type=jnp.float32)
            # height upsample + conv y-taps + channel mix : (Wo, NB*C*H) @ (NB*C*H, NB*C*Ho)
            p = jnp.dot(t, at_ref[k], preferred_element_type=jnp.float32)
            acc = p if acc is None else acc + p
        # bias broadcast over the Wo sublanes; lane-dense unmasked store.
        o_ref[...] = (acc + brow_ref[...]).astype(o_ref.dtype)
    return kernel


def _pick_group(N, C, H, Ho, nb_max=8):
    """Largest NB <= nb_max dividing N whose flattened group dims are lane-aligned."""
    for nb in range(min(N, nb_max), 0, -1):
        if N % nb:
            continue
        if nb == N or ((nb * C * H) % 128 == 0 and (nb * C * Ho) % 128 == 0):
            return nb
    return 1


def upsample_pallas(x, w=None, b=None, *, with_conv=True, nb=None):
    """x: (N, C, H, W). w: (C, C, 3, 3) PyTorch OIHW. b: (C,). Returns (N, C, 2H, 2W)."""
    N, C, H, W = x.shape
    Ho, Wo = 2 * H, 2 * W

    if nb is None:
        nb = _pick_group(N, C, H, Ho)
    if N % nb != 0 or not (nb == N or ((nb * C * H) % 128 == 0 and (nb * C * Ho) % 128 == 0)):
        raise ValueError(f"invalid images-per-step nb={nb} for shape {x.shape}")
    G = N // nb
    r_in, r_out = nb * C * H, nb * C * Ho

    Uh = bilinear_matrix(H, Ho)   # (Ho, H)
    Uw = bilinear_matrix(W, Wo)   # (Wo, W)

    if with_conv:
        assert w is not None and b is not None
        K = 3
        w32 = w.astype(jnp.float32)                                   # (Co, Ci, 3, 3) OIHW
        # Width matrices with the conv x-offset folded in: Uw_kx[x, w] = Uw[x+kx-1, w] (0 if OOR).
        uw_k = jnp.stack(
            [jnp.eye(Wo, k=kx - 1, dtype=jnp.float32) @ Uw for kx in range(3)])      # (3, Wo, W)
        # Height matrices with the conv y-offset folded in: UhS[ky][y, h] = Uh[y+ky-1, h] (0 if OOR).
        uhs = jnp.stack(
            [jnp.eye(Ho, k=ky - 1, dtype=jnp.float32) @ Uh for ky in range(3)])      # (3, Ho, H)
        # Per-image folded matrix (transposed):  A_kx^T[(ci,h),(co,y)] = sum_ky W[co,ci,ky,kx]*UhS[ky][y,h]
        a_img = jnp.einsum('oikx,kyh->xihoy', w32, uhs).reshape(3, C * H, C * Ho)
        at = jnp.stack([_block_diag(a_img[kx], nb) for kx in range(3)])              # (3, r_in, r_out)
        brow = jnp.tile(jnp.repeat(b.astype(jnp.float32), Ho), nb)[None, :]          # (1, r_out)
    else:
        K = 1
        uw_k = Uw[None]                                                              # (1, Wo, W)
        at = _block_diag(Uh.T, nb * C)[None]                                         # (1, r_in, r_out)
        brow = jnp.zeros((1, r_out), jnp.float32)

    # Transposed flat input: columns indexed by (n, c, h), rows by w.  HBM-side plumbing only.
    xt = jnp.transpose(x.reshape(N * C * H, W))                                      # (W, N*C*H)

    out_t = pl.pallas_call(
        _make_kernel(K),
        out_shape=jax.ShapeDtypeStruct((Wo, N * C * Ho), x.dtype),
        grid_spec=pltpu.PrefetchScalarGridSpec(
            num_scalar_prefetch=0,
            grid=(G,),
            in_specs=[
                pl.BlockSpec((W, r_in), lambda g: (0, g)),        # NB images per step
                pl.BlockSpec((K, Wo, W), lambda g: (0, 0, 0)),    # constant block -> fetched once
                pl.BlockSpec((K, r_in, r_out), lambda g: (0, 0, 0)),
                pl.BlockSpec((1, r_out), lambda g: (0, 0)),
            ],
            out_specs=pl.BlockSpec((Wo, r_out), lambda g: (0, g)),
        ),
        compiler_params=pltpu.CompilerParams(
            dimension_semantics=("parallel",),     # batch groups are independent (v7x: 2 TCs)
            vmem_limit_bytes=32 * 1024 * 1024,
        ),
    )(xt, uw_k, at, brow)

    # (Wo, N*C*Ho) -> (N, C, Ho, Wo): HBM-side layout plumbing in the wrapper.
    return jnp.transpose(out_t).reshape(N, C, Ho, Wo)


def _reference(x, w=None, b=None, *, with_conv=True):
    N, C, H, W = x.shape
    uh = bilinear_matrix(H, 2 * H)
    uw = bilinear_matrix(W, 2 * W)
    up = jnp.einsum('oh,nchw,pw->ncop', uh, x, uw)
    if not with_conv:
        return up
    conv = jax.lax.conv_general_dilated(
        up, w, window_strides=(1, 1), padding=((1, 1), (1, 1)),
        dimension_numbers=('NCHW', 'OIHW', 'NCHW'))
    return conv + b[None, :, None, None]


if __name__ == "__main__":
    key = jax.random.PRNGKey(0)
    kx_, kw_, kb_, kx4_ = jax.random.split(key, 4)

    N, C, H, W = 2, 4, 16, 16
    x = jax.random.normal(kx_, (N, C, H, W), jnp.float32)

    # Deterministic synthetic Conv2d(C, C, 3, padding=1) parameters (PyTorch-style init bounds).
    fan_in = C * 3 * 3
    bound = 1.0 / math.sqrt(fan_in)
    w = jax.random.uniform(kw_, (C, C, 3, 3), jnp.float32, -bound, bound)
    b = jax.random.uniform(kb_, (C,), jnp.float32, -bound, bound)

    # with conv (the configuration LightWarpingNetwork actually uses: resamp_with_conv=True)
    out = jax.block_until_ready(upsample_pallas(x, w, b, with_conv=True))
    ref = _reference(x, w, b, with_conv=True)
    assert out.shape == (N, C, 2 * H, 2 * W) and out.dtype == x.dtype
    assert float(jnp.max(jnp.abs(out - ref))) < 3e-4

    # plain bilinear upsample
    out_noconv = jax.block_until_ready(upsample_pallas(x, with_conv=False))
    up_ref = _reference(x, with_conv=False)
    assert float(jnp.max(jnp.abs(out_noconv - up_ref))) < 1e-4

    # multi-step grid: 4 images, 2 images per grid step (exercises batching + index maps)
    x4 = jax.random.normal(kx4_, (4, C, H, W), jnp.float32)
    out4 = jax.block_until_ready(upsample_pallas(x4, w, b, with_conv=True, nb=2))
    ref4 = _reference(x4, w, b, with_conv=True)
    assert float(jnp.max(jnp.abs(out4 - ref4))) < 3e-4

    print("KERNEL_OK")
</pallas_src>

<mosaic_0001>
module attributes {stable_mosaic.version = 11 : i64} {
  func.func @kernel(%arg0: i32, %arg1: memref<16x128xf32, #tpu.memory_space<vmem>>, %arg2: memref<3x32x16xf32, #tpu.memory_space<vmem>>, %arg3: memref<3x128x256xf32, #tpu.memory_space<vmem>>, %arg4: memref<1x256xf32, #tpu.memory_space<vmem>>, %arg5: memref<32x256xf32, #tpu.memory_space<vmem>>) attributes {dimension_semantics = [#tpu.dimension_semantics<parallel>], iteration_bounds = array<i64: 1>, scalar_prefetch = 0 : i64, scratch_operands = 0 : i64, tpu.core_type = #tpu.core_type<tc>, window_params = [{transform_indices = @transform_0, window_bounds = array<i64: 16, 128>}, {pipeline_mode = #tpu.pipeline_mode<synchronous>, transform_indices = @transform_1, window_bounds = array<i64: 3, 32, 16>}, {pipeline_mode = #tpu.pipeline_mode<synchronous>, transform_indices = @transform_2, window_bounds = array<i64: 3, 128, 256>}, {pipeline_mode = #tpu.pipeline_mode<synchronous>, transform_indices = @transform_3, window_bounds = array<i64: 1, 256>}, {transform_indices = @transform_4, window_bounds = array<i64: 32, 256>}]} {
    %c0 = arith.constant 0 : index
    %c0_0 = arith.constant 0 : index
    %0 = vector.load %arg1[%c0, %c0_0] : memref<16x128xf32, #tpu.memory_space<vmem>>, vector<16x128xf32>
    %c0_1 = arith.constant 0 : index
    %c0_2 = arith.constant 0 : index
    %c0_3 = arith.constant 0 : index
    %1 = vector.load %arg2[%c0_1, %c0_2, %c0_3] : memref<3x32x16xf32, #tpu.memory_space<vmem>>, vector<1x32x16xf32>
    %2 = vector.shape_cast %1 : vector<1x32x16xf32> to vector<32x16xf32>
    %cst = arith.constant dense<0.000000e+00> : vector<32x128xf32>
    %3 = tpu.matmul %2, %0, %cst {dimension_numbers = #tpu.dot_dimension_numbers<[1], [0], [0], [1], [0, 0, 1, 1], [], []>} : vector<32x16xf32>, vector<16x128xf32>, vector<32x128xf32> -> vector<32x128xf32>
    %c0_4 = arith.constant 0 : index
    %c0_5 = arith.constant 0 : index
    %c0_6 = arith.constant 0 : index
    %4 = vector.load %arg3[%c0_4, %c0_5, %c0_6] : memref<3x128x256xf32, #tpu.memory_space<vmem>>, vector<1x128x256xf32>
    %5 = vector.shape_cast %4 : vector<1x128x256xf32> to vector<128x256xf32>
    %cst_7 = arith.constant dense<0.000000e+00> : vector<32x256xf32>
    %6 = tpu.matmul %3, %5, %cst_7 {dimension_numbers = #tpu.dot_dimension_numbers<[1], [0], [0], [1], [0, 0, 1, 1], [], []>} : vector<32x128xf32>, vector<128x256xf32>, vector<32x256xf32> -> vector<32x256xf32>
    %c1 = arith.constant 1 : index
    %c0_8 = arith.constant 0 : index
    %c0_9 = arith.constant 0 : index
    %7 = vector.load %arg2[%c1, %c0_8, %c0_9] : memref<3x32x16xf32, #tpu.memory_space<vmem>>, vector<1x32x16xf32>
    %8 = vector.shape_cast %7 : vector<1x32x16xf32> to vector<32x16xf32>
    %cst_10 = arith.constant dense<0.000000e+00> : vector<32x128xf32>
    %9 = tpu.matmul %8, %0, %cst_10 {dimension_numbers = #tpu.dot_dimension_numbers<[1], [0], [0], [1], [0, 0, 1, 1], [], []>} : vector<32x16xf32>, vector<16x128xf32>, vector<32x128xf32> -> vector<32x128xf32>
    %c1_11 = arith.constant 1 : index
    %c0_12 = arith.constant 0 : index
    %c0_13 = arith.constant 0 : index
    %10 = vector.load %arg3[%c1_11, %c0_12, %c0_13] : memref<3x128x256xf32, #tpu.memory_space<vmem>>, vector<1x128x256xf32>
    %11 = vector.shape_cast %10 : vector<1x128x256xf32> to vector<128x256xf32>
    %cst_14 = arith.constant dense<0.000000e+00> : vector<32x256xf32>
    %12 = tpu.matmul %9, %11, %cst_14 {dimension_numbers = #tpu.dot_dimension_numbers<[1], [0], [0], [1], [0, 0, 1, 1], [], []>} : vector<32x128xf32>, vector<128x256xf32>, vector<32x256xf32> -> vector<32x256xf32>
    %13 = arith.addf %6, %12 : vector<32x256xf32>
    %c2 = arith.constant 2 : index
    %c0_15 = arith.constant 0 : index
    %c0_16 = arith.constant 0 : index
    %14 = vector.load %arg2[%c2, %c0_15, %c0_16] : memref<3x32x16xf32, #tpu.memory_space<vmem>>, vector<1x32x16xf32>
    %15 = vector.shape_cast %14 : vector<1x32x16xf32> to vector<32x16xf32>
    %cst_17 = arith.constant dense<0.000000e+00> : vector<32x128xf32>
    %16 = tpu.matmul %15, %0, %cst_17 {dimension_numbers = #tpu.dot_dimension_numbers<[1], [0], [0], [1], [0, 0, 1, 1], [], []>} : vector<32x16xf32>, vector<16x128xf32>, vector<32x128xf32> -> vector<32x128xf32>
    %c2_18 = arith.constant 2 : index
    %c0_19 = arith.constant 0 : index
    %c0_20 = arith.constant 0 : index
    %17 = vector.load %arg3[%c2_18, %c0_19, %c0_20] : memref<3x128x256xf32, #tpu.memory_space<vmem>>, vector<1x128x256xf32>
    %18 = vector.shape_cast %17 : vector<1x128x256xf32> to vector<128x256xf32>
    %cst_21 = arith.constant dense<0.000000e+00> : vector<32x256xf32>
    %19 = tpu.matmul %16, %18, %cst_21 {dimension_numbers = #tpu.dot_dimension_numbers<[1], [0], [0], [1], [0, 0, 1, 1], [], []>} : vector<32x128xf32>, vector<128x256xf32>, vector<32x256xf32> -> vector<32x256xf32>
    %20 = arith.addf %13, %19 : vector<32x256xf32>
    %c0_22 = arith.constant 0 : index
    %c0_23 = arith.constant 0 : index
    %21 = vector.load %arg4[%c0_22, %c0_23] : memref<1x256xf32, #tpu.memory_space<vmem>>, vector<1x256xf32>
    %22 = vector.broadcast %21 : vector<1x256xf32> to vector<32x256xf32>
    %23 = arith.addf %20, %22 : vector<32x256xf32>
    %c0_24 = arith.constant 0 : index
    %c0_25 = arith.constant 0 : index
    %24 = vector.load %arg5[%c0_24, %c0_25] : memref<32x256xf32, #tpu.memory_space<vmem>>, vector<32x256xf32>
    tpu.vector_store %arg5[%c0_24, %c0_25], %23 {strides = array<i32>} : memref<32x256xf32, #tpu.memory_space<vmem>>, vector<32x256xf32>,
    return
  }
  func.func @transform_0(%arg0: i32) -> (i32, i32) {
    %c0_i32 = arith.constant 0 : i32
    %c0_i32_0 = arith.constant 0 : i32
    return %c0_i32, %arg0 : i32, i32
  }
  func.func @transform_1(%arg0: i32) -> (i32, i32, i32) {
    %c0_i32 = arith.constant 0 : i32
    %c0_i32_0 = arith.constant 0 : i32
    %c0_i32_1 = arith.constant 0 : i32
    %c0_i32_2 = arith.constant 0 : i32
    return %c0_i32, %c0_i32_0, %c0_i32_1 : i32, i32, i32
  }
  func.func @transform_2(%arg0: i32) -> (i32, i32, i32) {
    %c0_i32 = arith.constant 0 : i32
    %c0_i32_0 = arith.constant 0 : i32
    %c0_i32_1 = arith.constant 0 : i32
    %c0_i32_2 = arith.constant 0 : i32
    return %c0_i32, %c0_i32_0, %c0_i32_1 : i32, i32, i32
  }
  func.func @transform_3(%arg0: i32) -> (i32, i32) {
    %c0_i32 = arith.constant 0 : i32
    %c0_i32_0 = arith.constant 0 : i32
    %c0_i32_1 = arith.constant 0 : i32
    return %c0_i32, %c0_i32_0 : i32, i32
  }
  func.func @transform_4(%arg0: i32) -> (i32, i32) {
    %c0_i32 = arith.constant 0 : i32
    %c0_i32_0 = arith.constant 0 : i32
    return %c0_i32, %arg0 : i32, i32
  }
}

</mosaic_0001>

<llo_original>
// kernel: tpu_custom_call.1
$region0: #{tpu_custom_call.1}
  #allocation0 [shape = 'u32[]', space=smem, size = 0x4, offset = 0x4, fixed_abs, tag = 'smem constant byte address 0x4 - core index']
  #allocation1 [shape = 'u32[144,128]{1,0:T(1,128)}', space=vmem, size = 0x12000, scoped, tag = 'internal scratch']
  %s0 = inlined_call_operand.vmem [shape: f32[16,128], index: 0, kind: input, shape index: {}]
  %s1 = inlined_call_operand.vmem [shape: f32[3,32,16], index: 1, kind: input, shape index: {}]
  %s2 = inlined_call_operand.hbm [shape: f32[3,128,256], index: 2, kind: input, shape index: {}]
  %s3 = inlined_call_operand.vmem [shape: f32[1,256], index: 3, kind: input, shape index: {}]
  %s4 = inlined_call_operand.hbm [shape: f32[32,256], index: 4, kind: output, shape index: {}]
  %s5 = sld [smem:[#allocation0]]
  $region30: #{tpu_custom_call.1} parent=0
    _
  %s7 = ssub.s32 1, %s5
  %s8 = scalar_select 0, %s7, %s5
  $region1: #{tpu_custom_call.1} parent=0
    #allocation2 [shape = 'u8[393216]{0}', space=vmem, size = 0x60000, scoped, tag = 'input window, operand 2, single buffered']
    #allocation3 [shape = 's32[1]{0}', space=sflag, size = 0x4, scoped, tag = 'scoped memory for tpu_custom_call.1']
    #allocation4 [shape = 's32[1]{0}', space=sflag, size = 0x4, scoped, tag = 'scoped memory for tpu_custom_call.1']
    #allocation5 [shape = 'u8[32768]{0}', space=vmem, size = 0x8000, scoped, tag = 'output window, operand 0, single buffered']
    %9 = vsyncpa [#allocation3], 0
    %10 = vsyncpa [#allocation4], 0
    // Predicated region
    $region2: #{tpu_custom_call.1} parent=1 // pred_check
      _
    $region3: #{tpu_custom_call.1} parent=1 // pred_check_branch
      %12 = sbr.rel (0) target = $region5
    $region4: #{tpu_custom_call.1} parent=1 // pred_region
      _
    $region5: #{tpu_custom_call.1} parent=1 // pred_fallthru
      _
    // Predicated region
    $region6: #{tpu_custom_call.1} parent=1 // pred_check
      _
    $region7: #{tpu_custom_call.1} parent=1 // pred_check_branch
      %14 = sbr.rel (0) target = $region9
    $region8: #{tpu_custom_call.1} parent=1 // pred_region
      _
    $region9: #{tpu_custom_call.1} parent=1 // pred_fallthru
      _
    // Predicated region
    $region10: #{tpu_custom_call.1} parent=1 // pred_check
      _
    $region11: #{tpu_custom_call.1} parent=1 // pred_check_branch
      %16 = sbr.rel (0) target = $region13
    $region12: #{tpu_custom_call.1} parent=1 // pred_region
      %s18 = ssub.s32 12288, 12288
      %19 = vsyncadd [#allocation3], %s18
      %s20 = sshll.u32 [#allocation2], 4
      %s21 = int_to_ptr.vmem [resolvable:$true] %s20
      %26 = dma.hbm_to_vmem [thread:$0]  %s2, 12288, %s21, [#allocation3], 256, 256, 16
    $region13: #{tpu_custom_call.1} parent=1 // pred_fallthru
      _
    // Predicated region
    $region14: #{tpu_custom_call.1} parent=1 // pred_check
      _
    $region15: #{tpu_custom_call.1} parent=1 // pred_check_branch
      %28 = sbr.rel (0) target = $region17
    $region16: #{tpu_custom_call.1} parent=1 // pred_region
      _
    $region17: #{tpu_custom_call.1} parent=1 // pred_fallthru
      _
    // Predicated region
    $region18: #{tpu_custom_call.1} parent=1 // pred_check
      _
    $region19: #{tpu_custom_call.1} parent=1 // pred_check_branch
      %30 = sbr.rel (0) target = $region21
    $region20: #{tpu_custom_call.1} parent=1 // pred_region
      %31 = dma.done [#allocation3], 12288
    $region21: #{tpu_custom_call.1} parent=1 // pred_fallthru
      _
    %v32 = vld [vmem:[%s0] sm:$0xff]
    %v33 = vld [vmem:[%s0 + $0x8] sm:$0xff]
    %v34 = vld [vmem:[%s1] sm:$0xff]
    %v35 = vld [vmem:[%s1 + $0x8] sm:$0xff]
    %v36 = vld [vmem:[%s1 + $0x10] sm:$0xff]
    %v37 = vld [vmem:[%s1 + $0x18] sm:$0xff]
    %vm38 = vcmask 130048
    %v40 = vsel %vm38, %v34, 0
    %v43 = vsel %vm38, %v35, 0
    %v46 = vsel %vm38, %v36, 0
    %v49 = vsel %vm38, %v37, 0
    %51 = vmatprep.subr.mxu0 0.0
    %52 = vmatpush1.msra.mxu0 %v32
    %53 = vmatprep.subr.mxu0 0.0
    %54 = vmatpush1.msra.mxu0 %v33
    %55 = vmatprep.subr.mxu0 0.0
    %56 = vmatpush1.msra.mxu0 0.0
    %57 = vmatprep.subr.mxu0 0.0
    %58 = vmatpush1.msra.mxu0 0.0
    %59 = vmatprep.subr.mxu0 0.0
    %60 = vmatpush1.msra.mxu0 0.0
    %61 = vmatprep.subr.mxu0 0.0
    %62 = vmatpush1.msra.mxu0 0.0
    %63 = vmatprep.subr.mxu0 0.0
    %64 = vmatpush1.msra.mxu0 0.0
    %65 = vmatprep.subr.mxu0 0.0
    %66 = vmatpush1.msra.mxu0 0.0
    %67 = vmatprep.subr.mxu0 0.0
    %68 = vmatpush1.msra.mxu0 0.0
    %69 = vmatprep.subr.mxu0 0.0
    %70 = vmatpush1.msra.mxu0 0.0
    %71 = vmatprep.subr.mxu0 0.0
    %72 = vmatpush1.msra.mxu0 0.0
    %73 = vmatprep.subr.mxu0 0.0
    %74 = vmatpush1.msra.mxu0 0.0
    %75 = vmatprep.subr.mxu0 0.0
    %76 = vmatpush1.msra.mxu0 0.0
    %77 = vmatprep.subr.mxu0 0.0
    %78 = vmatpush1.msra.mxu0 0.0
    %79 = vmatprep.subr.mxu0 0.0
    %80 = vmatpush1.msra.mxu0 0.0
    %81 = vmatprep.subr.mxu0 0.0
    %82 = vmatpush1.msra.mxu0 0.0
    %83 = vmatprep.subr.mxu0 0.0
    %84 = vmatpush1.msra.mxu0 0.0
    %85 = vmatprep.subr.mxu0 0.0
    %86 = vmatpush1.msra.mxu0 0.0
    %87 = vmatprep.subr.mxu0 0.0
    %88 = vmatpush1.msra.mxu0 0.0
    %89 = vmatprep.subr.mxu0 0.0
    %90 = vmatpush1.msra.mxu0 0.0
    %91 = vmatprep.subr.mxu0 0.0
    %92 = vmatpush1.msra.mxu0 0.0
    %93 = vmatprep.subr.mxu0 0.0
    %94 = vmatpush1.msra.mxu0 0.0
    %95 = vmatprep.subr.mxu0 0.0
    %96 = vmatpush1.msra.mxu0 0.0
    %97 = vmatprep.subr.mxu0 0.0
    %98 = vmatpush1.msra.mxu0 0.0
    %99 = vmatprep.subr.mxu0 0.0
    %100 = vmatpush1.msra.mxu0 0.0
    %101 = vmatprep.subr.mxu0 0.0
    %102 = vmatpush1.msra.mxu0 0.0
    %103 = vmatprep.subr.mxu0 0.0
    %104 = vmatpush1.msra.mxu0 0.0
    %105 = vmatprep.subr.mxu0 0.0
    %106 = vmatpush1.msra.mxu0 0.0
    %107 = vmatprep.subr.mxu0 0.0
    %108 = vmatpush1.msra.mxu0 0.0
    %109 = vmatprep.subr.mxu0 0.0
    %110 = vmatpush1.msra.mxu0 0.0
    %111 = vmatprep.subr.mxu0 0.0
    %112 = vmatpush1.msra.mxu0 0.0
    %113 = vmatprep.subr.mxu0 0.0
    %114 = vmatpush1.msra.mxu0 0.0
    %115 = vmatprep.mubr.f32.mxu0 0.0
    %116 = vmatmul.mubr.f32.gmra.mrb[0].mxu0 %v40
    %v117 = vpop.f32.mrb[0].mxu0
    %v118 = vadd.f32 0.0, %v117
    %v119 = vpop.f32.mrb[0].mxu0
    %120 = vmatprep.mubr.f32.mxu0 0.0
    %121 = vmatmul.mubr.f32.gmra.mrb[0].mxu0 %v43
    %v122 = vpop.f32.mrb[0].mxu0
    %v123 = vadd.f32 0.0, %v122
    %v124 = vpop.f32.mrb[0].mxu0
    %125 = vmatprep.mubr.f32.mxu0 0.0
    %126 = vmatmul.mubr.f32.gmra.mrb[0].mxu0 %v46
    %v127 = vpop.f32.mrb[0].mxu0
    %v128 = vadd.f32 0.0, %v127
    %v129 = vpop.f32.mrb[0].mxu0
    %130 = vmatprep.mubr.f32.mxu0 0.0
    %131 = vmatmul.mubr.f32.gmra.mrb[0].mxu0 %v49
    %v132 = vpop.f32.mrb[0].mxu0
    %v133 = vadd.f32 0.0, %v132
    %v134 = vpop.f32.mrb[0].mxu0
    %135 = vdwg.mxu0
    %v136 = vld [vmem:[#allocation2] sm:$0xff]
    %v137 = vld [vmem:[#allocation2 + $0x8] sm:$0xff]
    %v138 = vld [vmem:[#allocation2 + $0x10] sm:$0xff]
    %v139 = vld [vmem:[#allocation2 + $0x18] sm:$0xff]
    %v140 = vld [vmem:[#allocation2 + $0x20] sm:$0xff]
    %v141 = vld [vmem:[#allocation2 + $0x28] sm:$0xff]
    %v142 = vld [vmem:[#allocation2 + $0x30] sm:$0xff]
    %v143 = vld [vmem:[#allocation2 + $0x38] sm:$0xff]
    %v144 = vld [vmem:[#allocation2 + $0x40] sm:$0xff]
    %v145 = vld [vmem:[#allocation2 + $0x48] sm:$0xff]
    %v146 = vld [vmem:[#allocation2 + $0x50] sm:$0xff]
    %v147 = vld [vmem:[#allocation2 + $0x58] sm:$0xff]
    %v148 = vld [vmem:[#allocation2 + $0x60] sm:$0xff]
    %v149 = vld [vmem:[#allocation2 + $0x68] sm:$0xff]
    %v150 = vld [vmem:[#allocation2 + $0x70] sm:$0xff]
    %v151 = vld [vmem:[#allocation2 + $0x78] sm:$0xff]
    %v152 = vld [vmem:[#allocation2 + $0x80] sm:$0xff]
    %v153 = vld [vmem:[#allocation2 + $0x88] sm:$0xff]
    %v154 = vld [vmem:[#allocation2 + $0x90] sm:$0xff]
    %v155 = vld [vmem:[#allocation2 + $0x98] sm:$0xff]
    %v156 = vld [vmem:[#allocation2 + $0xa0] sm:$0xff]
    %v157 = vld [vmem:[#allocation2 + $0xa8] sm:$0xff]
    %v158 = vld [vmem:[#allocation2 + $0xb0] sm:$0xff]
    %v159 = vld [vmem:[#allocation2 + $0xb8] sm:$0xff]
    %v160 = vld [vmem:[#allocation2 + $0xc0] sm:$0xff]
    %v161 = vld [vmem:[#allocation2 + $0xc8] sm:$0xff]
    %v162 = vld [vmem:[#allocation2 + $0xd0] sm:$0xff]
    %v163 = vld [vmem:[#allocation2 + $0xd8] sm:$0xff]
    %v164 = vld [vmem:[#allocation2 + $0xe0] sm:$0xff]
    %v165 = vld [vmem:[#allocation2 + $0xe8] sm:$0xff]
    %v166 = vld [vmem:[#allocation2 + $0xf0] sm:$0xff]
    %v167 = vld [vmem:[#allocation2 + $0xf8] sm:$0xff]
    %s168 = scalar_lea.vmem %s1, 32
    %v169 = vld [vmem:[%s168] sm:$0xff]
    %v170 = vld [vmem:[%s168 + $0x8] sm:$0xff]
    %v171 = vld [vmem:[%s168 + $0x10] sm:$0xff]
    %v172 = vld [vmem:[%s168 + $0x18] sm:$0xff]
    %v174 = vsel %vm38, %v169, 0
    %v177 = vsel %vm38, %v170, 0
    %v180 = vsel %vm38, %v171, 0
    %v183 = vsel %vm38, %v172, 0
    %185 = vmatprep.subr.mxu0 0.0
    %186 = vmatpush1.msra.mxu0 %v32
    %187 = vmatprep.subr.mxu0 0.0
    %188 = vmatpush1.msra.mxu0 %v33
    %189 = vmatprep.subr.mxu0 0.0
    %190 = vmatpush1.msra.mxu0 0.0
    %191 = vmatprep.subr.mxu0 0.0
    %192 = vmatpush1.msra.mxu0 0.0
    %193 = vmatprep.subr.mxu0 0.0
    %194 = vmatpush1.msra.mxu0 0.0
    %195 = vmatprep.subr.mxu0 0.0
    %196 = vmatpush1.msra.mxu0 0.0
    %197 = vmatprep.subr.mxu0 0.0
    %198 = vmatpush1.msra.mxu0 0.0
    %199 = vmatprep.subr.mxu0 0.0
    %200 = vmatpush1.msra.mxu0 0.0
    %201 = vmatprep.subr.mxu0 0.0
    %202 = vmatpush1.msra.mxu0 0.0
    %203 = vmatprep.subr.mxu0 0.0
    %204 = vmatpush1.msra.mxu0 0.0
    %205 = vmatprep.subr.mxu0 0.0
    %206 = vmatpush1.msra.mxu0 0.0
    %207 = vmatprep.subr.mxu0 0.0
    %208 = vmatpush1.msra.mxu0 0.0
    %209 = vmatprep.subr.mxu0 0.0
    %210 = vmatpush1.msra.mxu0 0.0
    %211 = vmatprep.subr.mxu0 0.0
    %212 = vmatpush1.msra.mxu0 0.0
    %213 = vmatprep.subr.mxu0 0.0
    %214 = vmatpush1.msra.mxu0 0.0
    %215 = vmatprep.subr.mxu0 0.0
    %216 = vmatpush1.msra.mxu0 0.0
    %217 = vmatprep.subr.mxu0 0.0
    %218 = vmatpush1.msra.mxu0 0.0
    %219 = vmatprep.subr.mxu0 0.0
    %220 = vmatpush1.msra.mxu0 0.0
    %221 = vmatprep.subr.mxu0 0.0
    %222 = vmatpush1.msra.mxu0 0.0
    %223 = vmatprep.subr.mxu0 0.0
    %224 = vmatpush1.msra.mxu0 0.0
    %225 = vmatprep.subr.mxu0 0.0
    %226 = vmatpush1.msra.mxu0 0.0
    %227 = vmatprep.subr.mxu0 0.0
    %228 = vmatpush1.msra.mxu0 0.0
    %229 = vmatprep.subr.mxu0 0.0
    %230 = vmatpush1.msra.mxu0 0.0
    %231 = vmatprep.subr.mxu0 0.0
    %232 = vmatpush1.msra.mxu0 0.0
    %233 = vmatprep.subr.mxu0 0.0
    %234 = vmatpush1.msra.mxu0 0.0
    %235 = vmatprep.subr.mxu0 0.0
    %236 = vmatpush1.msra.mxu0 0.0
    %237 = vmatprep.subr.mxu0 0.0
    %238 = vmatpush1.msra.mxu0 0.0
    %239 = vmatprep.subr.mxu0 0.0
    %240 = vmatpush1.msra.mxu0 0.0
    %241 = vmatprep.subr.mxu0 0.0
    %242 = vmatpush1.msra.mxu0 0.0
    %243 = vmatprep.subr.mxu0 0.0
    %244 = vmatpush1.msra.mxu0 0.0
    %245 = vmatprep.subr.mxu0 0.0
    %246 = vmatpush1.msra.mxu0 0.0
    %247 = vmatprep.subr.mxu0 0.0
    %248 = vmatpush1.msra.mxu0 0.0
    %249 = vmatprep.mubr.f32.mxu0 0.0
    %250 = vmatmul.mubr.f32.gmra.mrb[0].mxu0 %v174
    %v251 = vpop.f32.mrb[0].mxu0
    %v252 = vadd.f32 0.0, %v251
    %v253 = vpop.f32.mrb[0].mxu0
    %254 = vmatprep.mubr.f32.mxu0 0.0
    %255 = vmatmul.mubr.f32.gmra.mrb[0].mxu0 %v177
    %v256 = vpop.f32.mrb[0].mxu0
    %v257 = vadd.f32 0.0, %v256
    %v258 = vpop.f32.mrb[0].mxu0
    %259 = vmatprep.mubr.f32.mxu0 0.0
    %260 = vmatmul.mubr.f32.gmra.mrb[0].mxu0 %v180
    %v261 = vpop.f32.mrb[0].mxu0
    %v262 = vadd.f32 0.0, %v261
    %v263 = vpop.f32.mrb[0].mxu0
    %264 = vmatprep.mubr.f32.mxu0 0.0
    %265 = vmatmul.mubr.f32.gmra.mrb[0].mxu0 %v183
    %v266 = vpop.f32.mrb[0].mxu0
    %v267 = vadd.f32 0.0, %v266
    %v268 = vpop.f32.mrb[0].mxu0
    %269 = vdwg.mxu0
    %s270 = scalar_lea.vmem [#allocation2], 256
    %v271 = vld [vmem:[%s270] sm:$0xff]
    %v272 = vld [vmem:[%s270 + $0x8] sm:$0xff]
    %v273 = vld [vmem:[%s270 + $0x10] sm:$0xff]
    %v274 = vld [vmem:[%s270 + $0x18] sm:$0xff]
    %v275 = vld [vmem:[%s270 + $0x20] sm:$0xff]
    %v276 = vld [vmem:[%s270 + $0x28] sm:$0xff]
    %v277 = vld [vmem:[%s270 + $0x30] sm:$0xff]
    %v278 = vld [vmem:[%s270 + $0x38] sm:$0xff]
    %v279 = vld [vmem:[%s270 + $0x40] sm:$0xff]
    %v280 = vld [vmem:[%s270 + $0x48] sm:$0xff]
    %v281 = vld [vmem:[%s270 + $0x50] sm:$0xff]
    %v282 = vld [vmem:[%s270 + $0x58] sm:$0xff]
    %v283 = vld [vmem:[%s270 + $0x60] sm:$0xff]
    %v284 = vld [vmem:[%s270 + $0x68] sm:$0xff]
    %v285 = vld [vmem:[%s270 + $0x70] sm:$0xff]
    %v286 = vld [vmem:[%s270 + $0x78] sm:$0xff]
    %v287 = vld [vmem:[%s270 + $0x80] sm:$0xff]
    %v288 = vld [vmem:[%s270 + $0x88] sm:$0xff]
    %v289 = vld [vmem:[%s270 + $0x90] sm:$0xff]
    %v290 = vld [vmem:[%s270 + $0x98] sm:$0xff]
    %v291 = vld [vmem:[%s270 + $0xa0] sm:$0xff]
    %v292 = vld [vmem:[%s270 + $0xa8] sm:$0xff]
    %v293 = vld [vmem:[%s270 + $0xb0] sm:$0xff]
    %v294 = vld [vmem:[%s270 + $0xb8] sm:$0xff]
    %v295 = vld [vmem:[%s270 + $0xc0] sm:$0xff]
    %v296 = vld [vmem:[%s270 + $0xc8] sm:$0xff]
    %v297 = vld [vmem:[%s270 + $0xd0] sm:$0xff]
    %v298 = vld [vmem:[%s270 + $0xd8] sm:$0xff]
    %v299 = vld [vmem:[%s270 + $0xe0] sm:$0xff]
    %v300 = vld [vmem:[%s270 + $0xe8] sm:$0xff]
    %v301 = vld [vmem:[%s270 + $0xf0] sm:$0xff]
    %v302 = vld [vmem:[%s270 + $0xf8] sm:$0xff]
    %303 = vmatprep.subr.mxu0 %v272
    %304 = vmatpush1.msra.mxu0 %v271
    %305 = vmatprep.subr.mxu0 %v274
    %306 = vmatpush1.msra.mxu0 %v273
    %307 = vmatprep.subr.mxu0 %v276
    %308 = vmatpush1.msra.mxu0 %v275
    %309 = vmatprep.subr.mxu0 %v278
    %310 = vmatpush1.msra.mxu0 %v277
    %311 = vmatprep.subr.mxu0 %v280
    %312 = vmatpush1.msra.mxu0 %v279
    %313 = vmatprep.subr.mxu0 %v282
    %314 = vmatpush1.msra.mxu0 %v281
    %315 = vmatprep.subr.mxu0 %v284
    %316 = vmatpush1.msra.mxu0 %v283
    %317 = vmatprep.subr.mxu0 %v286
    %318 = vmatpush1.msra.mxu0 %v285
    %319 = vmatprep.subr.mxu0 %v288
    %320 = vmatpush1.msra.mxu0 %v287
    %321 = vmatprep.subr.mxu0 %v290
    %322 = vmatpush1.msra.mxu0 %v289
    %323 = vmatprep.subr.mxu0 %v292
    %324 = vmatpush1.msra.mxu0 %v291
    %325 = vmatprep.subr.mxu0 %v294
    %326 = vmatpush1.msra.mxu0 %v293
    %327 = vmatprep.subr.mxu0 %v296
    %328 = vmatpush1.msra.mxu0 %v295
    %329 = vmatprep.subr.mxu0 %v298
    %330 = vmatpush1.msra.mxu0 %v297
    %331 = vmatprep.subr.mxu0 %v300
    %332 = vmatpush1.msra.mxu0 %v299
    %333 = vmatprep.subr.mxu0 %v302
    %334 = vmatpush1.msra.mxu0 %v301
    %335 = vmatprep.subr.mxu0 0.0
    %336 = vmatpush1.msra.mxu0 0.0
    %337 = vmatprep.subr.mxu0 0.0
    %338 = vmatpush1.msra.mxu0 0.0
    %339 = vmatprep.subr.mxu0 0.0
    %340 = vmatpush1.msra.mxu0 0.0
    %341 = vmatprep.subr.mxu0 0.0
    %342 = vmatpush1.msra.mxu0 0.0
    %343 = vmatprep.subr.mxu0 0.0
    %344 = vmatpush1.msra.mxu0 0.0
    %345 = vmatprep.subr.mxu0 0.0
    %346 = vmatpush1.msra.mxu0 0.0
    %347 = vmatprep.subr.mxu0 0.0
    %348 = vmatpush1.msra.mxu0 0.0
    %349 = vmatprep.subr.mxu0 0.0
    %350 = vmatpush1.msra.mxu0 0.0
    %351 = vmatprep.subr.mxu0 0.0
    %352 = vmatpush1.msra.mxu0 0.0
    %353 = vmatprep.subr.mxu0 0.0
    %354 = vmatpush1.msra.mxu0 0.0
    %355 = vmatprep.subr.mxu0 0.0
    %356 = vmatpush1.msra.mxu0 0.0
    %357 = vmatprep.subr.mxu0 0.0
    %358 = vmatpush1.msra.mxu0 0.0
    %359 = vmatprep.subr.mxu0 0.0
    %360 = vmatpush1.msra.mxu0 0.0
    %361 = vmatprep.subr.mxu0 0.0
    %362 = vmatpush1.msra.mxu0 0.0
    %363 = vmatprep.subr.mxu0 0.0
    %364 = vmatpush1.msra.mxu0 0.0
    %365 = vmatprep.subr.mxu0 0.0
    %366 = vmatpush1.msra.mxu0 0.0
    %367 = vmatprep.mubr.f32.mxu0 0.0
    %368 = vmatmul.mubr.f32.gmra.mrb[0].mxu0 %v252
    %v369 = vpop.f32.mrb[0].mxu0
    %v370 = vadd.f32 0.0, %v369
    %v371 = vpop.f32.mrb[0].mxu0
    %v372 = vadd.f32 0.0, %v371
    %373 = vmatprep.mubr.f32.mxu0 0.0
    %374 = vmatmul.mubr.f32.gmra.mrb[0].mxu0 %v257
    %v375 = vpop.f32.mrb[0].mxu0
    %v376 = vadd.f32 0.0, %v375
    %v377 = vpop.f32.mrb[0].mxu0
    %v378 = vadd.f32 0.0, %v377
    %379 = vmatprep.mubr.f32.mxu0 0.0
    %380 = vmatmul.mubr.f32.gmra.mrb[0].mxu0 %v262
    %v381 = vpop.f32.mrb[0].mxu0
    %v382 = vadd.f32 0.0, %v381
    %v383 = vpop.f32.mrb[0].mxu0
    %v384 = vadd.f32 0.0, %v383
    %385 = vmatprep.mubr.f32.mxu0 0.0
    %386 = vmatmul.mubr.f32.gmra.mrb[0].mxu0 %v267
    %v387 = vpop.f32.mrb[0].mxu0
    %v388 = vadd.f32 0.0, %v387
    %v389 = vpop.f32.mrb[0].mxu0
    %v390 = vadd.f32 0.0, %v389
    %391 = vdwg.mxu0
    %392 = vmatprep.subr.mxu0 %v137
    %393 = vmatpush1.msra.mxu0 %v136
    %394 = vmatprep.subr.mxu0 %v139
    %395 = vmatpush1.msra.mxu0 %v138
    %396 = vmatprep.subr.mxu0 %v141
    %397 = vmatpush1.msra.mxu0 %v140
    %398 = vmatprep.subr.mxu0 %v143
    %399 = vmatpush1.msra.mxu0 %v142
    %400 = vmatprep.subr.mxu0 %v145
    %401 = vmatpush1.msra.mxu0 %v144
    %402 = vmatprep.subr.mxu0 %v147
    %403 = vmatpush1.msra.mxu0 %v146
    %404 = vmatprep.subr.mxu0 %v149
    %405 = vmatpush1.msra.mxu0 %v148
    %406 = vmatprep.subr.mxu0 %v151
    %407 = vmatpush1.msra.mxu0 %v150
    %408 = vmatprep.subr.mxu0 %v153
    %409 = vmatpush1.msra.mxu0 %v152
    %410 = vmatprep.subr.mxu0 %v155
    %411 = vmatpush1.msra.mxu0 %v154
    %412 = vmatprep.subr.mxu0 %v157
    %413 = vmatpush1.msra.mxu0 %v156
    %414 = vmatprep.subr.mxu0 %v159
    %415 = vmatpush1.msra.mxu0 %v158
    %416 = vmatprep.subr.mxu0 %v161
    %417 = vmatpush1.msra.mxu0 %v160
    %418 = vmatprep.subr.mxu0 %v163
    %419 = vmatpush1.msra.mxu0 %v162
    %420 = vmatprep.subr.mxu0 %v165
    %421 = vmatpush1.msra.mxu0 %v164
    %422 = vmatprep.subr.mxu0 %v167
    %423 = vmatpush1.msra.mxu0 %v166
    %424 = vmatprep.subr.mxu0 0.0
    %425 = vmatpush1.msra.mxu0 0.0
    %426 = vmatprep.subr.mxu0 0.0
    %427 = vmatpush1.msra.mxu0 0.0
    %428 = vmatprep.subr.mxu0 0.0
    %429 = vmatpush1.msra.mxu0 0.0
    %430 = vmatprep.subr.mxu0 0.0
    %431 = vmatpush1.msra.mxu0 0.0
    %432 = vmatprep.subr.mxu0 0.0
    %433 = vmatpush1.msra.mxu0 0.0
    %434 = vmatprep.subr.mxu0 0.0
    %435 = vmatpush1.msra.mxu0 0.0
    %436 = vmatprep.subr.mxu0 0.0
    %437 = vmatpush1.msra.mxu0 0.0
    %438 = vmatprep.subr.mxu0 0.0
    %439 = vmatpush1.msra.mxu0 0.0
    %440 = vmatprep.subr.mxu0 0.0
    %441 = vmatpush1.msra.mxu0 0.0
    %442 = vmatprep.subr.mxu0 0.0
    %443 = vmatpush1.msra.mxu0 0.0
    %444 = vmatprep.subr.mxu0 0.0
    %445 = vmatpush1.msra.mxu0 0.0
    %446 = vmatprep.subr.mxu0 0.0
    %447 = vmatpush1.msra.mxu0 0.0
    %448 = vmatprep.subr.mxu0 0.0
    %449 = vmatpush1.msra.mxu0 0.0
    %450 = vmatprep.subr.mxu0 0.0
    %451 = vmatpush1.msra.mxu0 0.0
    %452 = vmatprep.subr.mxu0 0.0
    %453 = vmatpush1.msra.mxu0 0.0
    %454 = vmatprep.subr.mxu0 0.0
    %455 = vmatpush1.msra.mxu0 0.0
    %456 = vmatprep.mubr.f32.mxu0 0.0
    %457 = vmatmul.mubr.f32.gmra.mrb[0].mxu0 %v118
    %v458 = vpop.f32.mrb[0].mxu0
    %v459 = vadd.f32 %v370, %v458
    %v460 = vpop.f32.mrb[0].mxu0
    %v461 = vadd.f32 %v372, %v460
    %462 = vmatprep.mubr.f32.mxu0 0.0
    %463 = vmatmul.mubr.f32.gmra.mrb[0].mxu0 %v123
    %v464 = vpop.f32.mrb[0].mxu0
    %v465 = vadd.f32 %v376, %v464
    %v466 = vpop.f32.mrb[0].mxu0
    %v467 = vadd.f32 %v378, %v466
    %468 = vmatprep.mubr.f32.mxu0 0.0
    %469 = vmatmul.mubr.f32.gmra.mrb[0].mxu0 %v128
    %v470 = vpop.f32.mrb[0].mxu0
    %v471 = vadd.f32 %v382, %v470
    %v472 = vpop.f32.mrb[0].mxu0
    %v473 = vadd.f32 %v384, %v472
    %474 = vmatprep.mubr.f32.mxu0 0.0
    %475 = vmatmul.mubr.f32.gmra.mrb[0].mxu0 %v133
    %v476 = vpop.f32.mrb[0].mxu0
    %v477 = vadd.f32 %v388, %v476
    %v478 = vpop.f32.mrb[0].mxu0
    %v479 = vadd.f32 %v390, %v478
    %480 = vdwg.mxu0
    %s481 = scalar_lea.vmem %s1, 64
    %v482 = vld [vmem:[%s481] sm:$0xff]
    %v483 = vld [vmem:[%s481 + $0x8] sm:$0xff]
    %v484 = vld [vmem:[%s481 + $0x10] sm:$0xff]
    %v485 = vld [vmem:[%s481 + $0x18] sm:$0xff]
    %v487 = vsel %vm38, %v482, 0
    %v490 = vsel %vm38, %v483, 0
    %v493 = vsel %vm38, %v484, 0
    %v496 = vsel %vm38, %v485, 0
    %498 = vmatprep.subr.mxu0 0.0
    %499 = vmatpush1.msra.mxu0 %v32
    %500 = vmatprep.subr.mxu0 0.0
    %501 = vmatpush1.msra.mxu0 %v33
    %502 = vmatprep.subr.mxu0 0.0
    %503 = vmatpush1.msra.mxu0 0.0
    %504 = vmatprep.subr.mxu0 0.0
    %505 = vmatpush1.msra.mxu0 0.0
    %506 = vmatprep.subr.mxu0 0.0
    %507 = vmatpush1.msra.mxu0 0.0
    %508 = vmatprep.subr.mxu0 0.0
    %509 = vmatpush1.msra.mxu0 0.0
    %510 = vmatprep.subr.mxu0 0.0
    %511 = vmatpush1.msra.mxu0 0.0
    %512 = vmatprep.subr.mxu0 0.0
    %513 = vmatpush1.msra.mxu0 0.0
    %514 = vmatprep.subr.mxu0 0.0
    %515 = vmatpush1.msra.mxu0 0.0
    %516 = vmatprep.subr.mxu0 0.0
    %517 = vmatpush1.msra.mxu0 0.0
    %518 = vmatprep.subr.mxu0 0.0
    %519 = vmatpush1.msra.mxu0 0.0
    %520 = vmatprep.subr.mxu0 0.0
    %521 = vmatpush1.msra.mxu0 0.0
    %522 = vmatprep.subr.mxu0 0.0
    %523 = vmatpush1.msra.mxu0 0.0
    %524 = vmatprep.subr.mxu0 0.0
    %525 = vmatpush1.msra.mxu0 0.0
    %526 = vmatprep.subr.mxu0 0.0
    %527 = vmatpush1.msra.mxu0 0.0
    %528 = vmatprep.subr.mxu0 0.0
    %529 = vmatpush1.msra.mxu0 0.0
    %530 = vmatprep.subr.mxu0 0.0
    %531 = vmatpush1.msra.mxu0 0.0
    %532 = vmatprep.subr.mxu0 0.0
    %533 = vmatpush1.msra.mxu0 0.0
    %534 = vmatprep.subr.mxu0 0.0
    %535 = vmatpush1.msra.mxu0 0.0
    %536 = vmatprep.subr.mxu0 0.0
    %537 = vmatpush1.msra.mxu0 0.0
    %538 = vmatprep.subr.mxu0 0.0
    %539 = vmatpush1.msra.mxu0 0.0
    %540 = vmatprep.subr.mxu0 0.0
    %541 = vmatpush1.msra.mxu0 0.0
    %542 = vmatprep.subr.mxu0 0.0
    %543 = vmatpush1.msra.mxu0 0.0
    %544 = vmatprep.subr.mxu0 0.0
    %545 = vmatpush1.msra.mxu0 0.0
    %546 = vmatprep.subr.mxu0 0.0
    %547 = vmatpush1.msra.mxu0 0.0
    %548 = vmatprep.subr.mxu0 0.0
    %549 = vmatpush1.msra.mxu0 0.0
    %550 = vmatprep.subr.mxu0 0.0
    %551 = vmatpush1.msra.mxu0 0.0
    %552 = vmatprep.subr.mxu0 0.0
    %553 = vmatpush1.msra.mxu0 0.0
    %554 = vmatprep.subr.mxu0 0.0
    %555 = vmatpush1.msra.mxu0 0.0
    %556 = vmatprep.subr.mxu0 0.0
    %557 = vmatpush1.msra.mxu0 0.0
    %558 = vmatprep.subr.mxu0 0.0
    %559 = vmatpush1.msra.mxu0 0.0
    %560 = vmatprep.subr.mxu0 0.0
    %561 = vmatpush1.msra.mxu0 0.0
    %562 = vmatprep.mubr.f32.mxu0 0.0
    %563 = vmatmul.mubr.f32.gmra.mrb[0].mxu0 %v487
    %v564 = vpop.f32.mrb[0].mxu0
    %v565 = vadd.f32 0.0, %v564
    %v566 = vpop.f32.mrb[0].mxu0
    %567 = vmatprep.mubr.f32.mxu0 0.0
    %568 = vmatmul.mubr.f32.gmra.mrb[0].mxu0 %v490
    %v569 = vpop.f32.mrb[0].mxu0
    %v570 = vadd.f32 0.0, %v569
    %v571 = vpop.f32.mrb[0].mxu0
    %572 = vmatprep.mubr.f32.mxu0 0.0
    %573 = vmatmul.mubr.f32.gmra.mrb[0].mxu0 %v493
    %v574 = vpop.f32.mrb[0].mxu0
    %v575 = vadd.f32 0.0, %v574
    %v576 = vpop.f32.mrb[0].mxu0
    %577 = vmatprep.mubr.f32.mxu0 0.0
    %578 = vmatmul.mubr.f32.gmra.mrb[0].mxu0 %v496
    %v579 = vpop.f32.mrb[0].mxu0
    %v580 = vadd.f32 0.0, %v579
    %v581 = vpop.f32.mrb[0].mxu0
    %582 = vdwg.mxu0
    %s583 = scalar_lea.vmem [#allocation2], 512
    %v584 = vld [vmem:[%s583] sm:$0xff]
    %v585 = vld [vmem:[%s583 + $0x8] sm:$0xff]
    %v586 = vld [vmem:[%s583 + $0x10] sm:$0xff]
    %v587 = vld [vmem:[%s583 + $0x18] sm:$0xff]
    %v588 = vld [vmem:[%s583 + $0x20] sm:$0xff]
    %v589 = vld [vmem:[%s583 + $0x28] sm:$0xff]
    %v590 = vld [vmem:[%s583 + $0x30] sm:$0xff]
    %v591 = vld [vmem:[%s583 + $0x38] sm:$0xff]
    %v592 = vld [vmem:[%s583 + $0x40] sm:$0xff]
    %v593 = vld [vmem:[%s583 + $0x48] sm:$0xff]
    %v594 = vld [vmem:[%s583 + $0x50] sm:$0xff]
    %v595 = vld [vmem:[%s583 + $0x58] sm:$0xff]
    %v596 = vld [vmem:[%s583 + $0x60] sm:$0xff]
    %v597 = vld [vmem:[%s583 + $0x68] sm:$0xff]
    %v598 = vld [vmem:[%s583 + $0x70] sm:$0xff]
    %v599 = vld [vmem:[%s583 + $0x78] sm:$0xff]
    %v600 = vld [vmem:[%s583 + $0x80] sm:$0xff]
    %v601 = vld [vmem:[%s583 + $0x88] sm:$0xff]
    %v602 = vld [vmem:[%s583 + $0x90] sm:$0xff]
    %v603 = vld [vmem:[%s583 + $0x98] sm:$0xff]
    %v604 = vld [vmem:[%s583 + $0xa0] sm:$0xff]
    %v605 = vld [vmem:[%s583 + $0xa8] sm:$0xff]
    %v606 = vld [vmem:[%s583 + $0xb0] sm:$0xff]
    %v607 = vld [vmem:[%s583 + $0xb8] sm:$0xff]
    %v608 = vld [vmem:[%s583 + $0xc0] sm:$0xff]
    %v609 = vld [vmem:[%s583 + $0xc8] sm:$0xff]
    %v610 = vld [vmem:[%s583 + $0xd0] sm:$0xff]
    %v611 = vld [vmem:[%s583 + $0xd8] sm:$0xff]
    %v612 = vld [vmem:[%s583 + $0xe0] sm:$0xff]
    %v613 = vld [vmem:[%s583 + $0xe8] sm:$0xff]
    %v614 = vld [vmem:[%s583 + $0xf0] sm:$0xff]
    %v615 = vld [vmem:[%s583 + $0xf8] sm:$0xff]
    %616 = vmatprep.subr.mxu0 %v585
    %617 = vmatpush1.msra.mxu0 %v584
    %618 = vmatprep.subr.mxu0 %v587
    %619 = vmatpush1.msra.mxu0 %v586
    %620 = vmatprep.subr.mxu0 %v589
    %621 = vmatpush1.msra.mxu0 %v588
    %622 = vmatprep.subr.mxu0 %v591
    %623 = vmatpush1.msra.mxu0 %v590
    %624 = vmatprep.subr.mxu0 %v593
    %625 = vmatpush1.msra.mxu0 %v592
    %626 = vmatprep.subr.mxu0 %v595
    %627 = vmatpush1.msra.mxu0 %v594
    %628 = vmatprep.subr.mxu0 %v597
    %629 = vmatpush1.msra.mxu0 %v596
    %630 = vmatprep.subr.mxu0 %v599
    %631 = vmatpush1.msra.mxu0 %v598
    %632 = vmatprep.subr.mxu0 %v601
    %633 = vmatpush1.msra.mxu0 %v600
    %634 = vmatprep.subr.mxu0 %v603
    %635 = vmatpush1.msra.mxu0 %v602
    %636 = vmatprep.subr.mxu0 %v605
    %637 = vmatpush1.msra.mxu0 %v604
    %638 = vmatprep.subr.mxu0 %v607
    %639 = vmatpush1.msra.mxu0 %v606
    %640 = vmatprep.subr.mxu0 %v609
    %641 = vmatpush1.msra.mxu0 %v608
    %642 = vmatprep.subr.mxu0 %v611
    %643 = vmatpush1.msra.mxu0 %v610
    %644 = vmatprep.subr.mxu0 %v613
    %645 = vmatpush1.msra.mxu0 %v612
    %646 = vmatprep.subr.mxu0 %v615
    %647 = vmatpush1.msra.mxu0 %v614
    %648 = vmatprep.subr.mxu0 0.0
    %649 = vmatpush1.msra.mxu0 0.0
    %650 = vmatprep.subr.mxu0 0.0
    %651 = vmatpush1.msra.mxu0 0.0
    %652 = vmatprep.subr.mxu0 0.0
    %653 = vmatpush1.msra.mxu0 0.0
    %654 = vmatprep.subr.mxu0 0.0
    %655 = vmatpush1.msra.mxu0 0.0
    %656 = vmatprep.subr.mxu0 0.0
    %657 = vmatpush1.msra.mxu0 0.0
    %658 = vmatprep.subr.mxu0 0.0
    %659 = vmatpush1.msra.mxu0 0.0
    %660 = vmatprep.subr.mxu0 0.0
    %661 = vmatpush1.msra.mxu0 0.0
    %662 = vmatprep.subr.mxu0 0.0
    %663 = vmatpush1.msra.mxu0 0.0
    %664 = vmatprep.subr.mxu0 0.0
    %665 = vmatpush1.msra.mxu0 0.0
    %666 = vmatprep.subr.mxu0 0.0
    %667 = vmatpush1.msra.mxu0 0.0
    %668 = vmatprep.subr.mxu0 0.0
    %669 = vmatpush1.msra.mxu0 0.0
    %670 = vmatprep.subr.mxu0 0.0
    %671 = vmatpush1.msra.mxu0 0.0
    %672 = vmatprep.subr.mxu0 0.0
    %673 = vmatpush1.msra.mxu0 0.0
    %674 = vmatprep.subr.mxu0 0.0
    %675 = vmatpush1.msra.mxu0 0.0
    %676 = vmatprep.subr.mxu0 0.0
    %677 = vmatpush1.msra.mxu0 0.0
    %678 = vmatprep.subr.mxu0 0.0
    %679 = vmatpush1.msra.mxu0 0.0
    %680 = vmatprep.mubr.f32.mxu0 0.0
    %681 = vmatmul.mubr.f32.gmra.mrb[0].mxu0 %v565
    %v682 = vpop.f32.mrb[0].mxu0
    %v683 = vadd.f32 0.0, %v682
    %v684 = vpop.f32.mrb[0].mxu0
    %v685 = vadd.f32 0.0, %v684
    %686 = vmatprep.mubr.f32.mxu0 0.0
    %687 = vmatmul.mubr.f32.gmra.mrb[0].mxu0 %v570
    %v688 = vpop.f32.mrb[0].mxu0
    %v689 = vadd.f32 0.0, %v688
    %v690 = vpop.f32.mrb[0].mxu0
    %v691 = vadd.f32 0.0, %v690
    %692 = vmatprep.mubr.f32.mxu0 0.0
    %693 = vmatmul.mubr.f32.gmra.mrb[0].mxu0 %v575
    %v694 = vpop.f32.mrb[0].mxu0
    %v695 = vadd.f32 0.0, %v694
    %v696 = vpop.f32.mrb[0].mxu0
    %v697 = vadd.f32 0.0, %v696
    %698 = vmatprep.mubr.f32.mxu0 0.0
    %699 = vmatmul.mubr.f32.gmra.mrb[0].mxu0 %v580
    %v700 = vpop.f32.mrb[0].mxu0
    %v701 = vadd.f32 0.0, %v700
    %v702 = vpop.f32.mrb[0].mxu0
    %v703 = vadd.f32 0.0, %v702
    %704 = vdwg.mxu0
    %v705 = vadd.f32 %v459, %v683
    %v706 = vadd.f32 %v461, %v685
    %v707 = vadd.f32 %v465, %v689
    %v708 = vadd.f32 %v467, %v691
    %v709 = vadd.f32 %v471, %v695
    %v710 = vadd.f32 %v473, %v697
    %v711 = vadd.f32 %v477, %v701
    %v712 = vadd.f32 %v479, %v703
    %v713 = vld [vmem:[%s3] sm:$0x3]
    %v715 = vlaneseq
    %v716 = vshrl.u32 %v715, 7
    %v717 = vsub.s32 0, %v716
    %v718 = vrot.slane %v713, %v717
    %v719 = vlaneseq
    %v720 = vshrl.u32 %v719, 7
    %v721 = vsub.s32 1, %v720
    %v722 = vrot.slane %v713, %v721
    %v725 = vadd.f32 %v705, %v718
    %v726 = vadd.f32 %v706, %v722
    %v727 = vadd.f32 %v707, %v718
    %v728 = vadd.f32 %v708, %v722
    %v729 = vadd.f32 %v709, %v718
    %v730 = vadd.f32 %v710, %v722
    %v731 = vadd.f32 %v711, %v718
    %v732 = vadd.f32 %v712, %v722
    %733 = vst [vmem:[#allocation5] sm:$0xff] %v725
    %734 = vst [vmem:[#allocation5 + $0x8] sm:$0xff] %v726
    %735 = vst [vmem:[#allocation5 + $0x10] sm:$0xff] %v727
    %736 = vst [vmem:[#allocation5 + $0x18] sm:$0xff] %v728
    %737 = vst [vmem:[#allocation5 + $0x20] sm:$0xff] %v729
    %738 = vst [vmem:[#allocation5 + $0x28] sm:$0xff] %v730
    %739 = vst [vmem:[#allocation5 + $0x30] sm:$0xff] %v731
    %740 = vst [vmem:[#allocation5 + $0x38] sm:$0xff] %v732
    // Predicated region
    $region22: #{tpu_custom_call.1} parent=1 // pred_check
      _
    $region23: #{tpu_custom_call.1} parent=1 // pred_check_branch
      %742 = sbr.rel (0) target = $region25
    $region24: #{tpu_custom_call.1} parent=1 // pred_region
      %s744 = ssub.s32 1024, 1024
      %745 = vsyncadd [#allocation4], %s744
      %s746 = sshll.u32 [#allocation5], 4
      %s747 = int_to_ptr.vmem [resolvable:$true] %s746
      %752 = dma.vmem_to_hbm [thread:$0]  %s747, 1024, %s4, [#allocation4], 256, 256, 16
    $region25: #{tpu_custom_call.1} parent=1 // pred_fallthru
      _
    // Predicated region
    $region26: #{tpu_custom_call.1} parent=1 // pred_check
      _
    $region27: #{tpu_custom_call.1} parent=1 // pred_check_branch
      %754 = sbr.rel (0) target = $region29
    $region28: #{tpu_custom_call.1} parent=1 // pred_region
      %755 = dma.done [#allocation4], 1024
    $region29: #{tpu_custom_call.1} parent=1 // pred_fallthru
      _
    %756 = vsyncpa [#allocation3], 1
    %757 = vsyncpa [#allocation4], 1

</llo_original>
